<compile_context>
chip_gen: v7x
topology: tpu7x:2x2x1
jax: 0.10.0
libtpu: 0.0.40
codegen_flags: <defaults>
</compile_context>

<pallas_src>
import functools

import jax
import jax.numpy as jnp
from jax.experimental import pallas as pl
from jax.experimental.pallas import tpu as pltpu

EPS = 1e-5  # PyTorch nn.LayerNorm default


def _round_up(a, b):
    return (a + b - 1) // b * b


def _prenorm_kernel(x_ref, g_ref, b_ref, w_ref, wb_ref, o_ref):
    # x_ref: (TM, D); g/b: (1, D) f32; w: (D, TN); wb: (1, TN) f32; o: (TM, TN)
    x = x_ref[...].astype(jnp.float32)

    # --- LayerNorm over last axis (biased variance + eps, like PyTorch) ---
    mean = jnp.mean(x, axis=-1, keepdims=True)
    centered = x - mean
    var = jnp.mean(centered * centered, axis=-1, keepdims=True)
    xhat = centered * jax.lax.rsqrt(var + EPS)
    y = xhat * g_ref[...] + b_ref[...]          # gamma/beta already f32

    # --- fn: Linear on the MXU (operands in weight dtype, f32 accumulation) ---
    y = y.astype(w_ref.dtype)
    out = jnp.dot(y, w_ref[...], preferred_element_type=jnp.float32)
    out = out + wb_ref[...]                      # bias already f32
    o_ref[...] = out.astype(o_ref.dtype)


@functools.partial(jax.jit, static_argnames=("tm", "tn"))
def prenorm_forward(x, gamma, beta, w, wb, *, tm=256, tn=512):
    """x: (B, N, D) -> (B, N, DO) = Linear(LayerNorm(x))."""
    B, N, D = x.shape
    DO = w.shape[1]
    M = B * N

    # Row tiling: big tiles for MXU/HBM efficiency; pad ragged row counts.
    tm_eff = tm if M >= tm else max(8, _round_up(M, 8))
    Mp = _round_up(M, tm_eff)

    # Output-column tiling: lane-dense (multiple of 128); tile DO so the
    # resident weight block stays small (fits v7x 64 MiB / v5e scoped VMEM).
    DOp = _round_up(DO, 128)
    if DOp <= tn:
        tn_eff = DOp
    else:
        DOp = _round_up(DO, tn)
        tn_eff = tn

    x2 = x.reshape(M, D)
    if Mp != M:
        x2 = jnp.pad(x2, ((0, Mp - M), (0, 0)))
    w_p = w if DOp == DO else jnp.pad(w, ((0, 0), (0, DOp - DO)))
    wb_p = wb if DOp == DO else jnp.pad(wb, ((0, DOp - DO),))

    # Cast small params to f32 once, outside the kernel (no per-step casts).
    g2 = gamma.reshape(1, D).astype(jnp.float32)
    b2 = beta.reshape(1, D).astype(jnp.float32)
    wb2 = wb_p.reshape(1, DOp).astype(jnp.float32)

    out_dtype = x.dtype
    isz = lambda d: jnp.dtype(d).itemsize

    # VMEM budget: double-buffered blocks + f32 temporaries + headroom.
    vmem_bytes = 2 * (tm_eff * D * isz(x.dtype)
                      + D * tn_eff * isz(w.dtype)
                      + tm_eff * tn_eff * isz(out_dtype)
                      + 2 * D * 4 + tn_eff * 4)
    vmem_bytes = int(vmem_bytes * 2) + (8 << 20)
    vmem_bytes = max(32 << 20, min(vmem_bytes, 64 << 20))

    cost = pl.CostEstimate(
        flops=2 * Mp * D * DOp,
        transcendentals=0,
        bytes_accessed=(Mp * D * isz(x.dtype)
                        + D * DOp * isz(w.dtype)
                        + Mp * DOp * isz(out_dtype)))

    out2 = pl.pallas_call(
        _prenorm_kernel,
        out_shape=jax.ShapeDtypeStruct((Mp, DOp), out_dtype),
        grid_spec=pltpu.PrefetchScalarGridSpec(
            num_scalar_prefetch=0,
            grid=(Mp // tm_eff, DOp // tn_eff),
            in_specs=[
                pl.BlockSpec((tm_eff, D), lambda i, j: (i, 0)),   # x row tile
                pl.BlockSpec((1, D), lambda i, j: (0, 0)),        # gamma (f32)
                pl.BlockSpec((1, D), lambda i, j: (0, 0)),        # beta  (f32)
                pl.BlockSpec((D, tn_eff), lambda i, j: (0, j)),   # fn weight
                pl.BlockSpec((1, tn_eff), lambda i, j: (0, j)),   # fn bias (f32)
            ],
            out_specs=pl.BlockSpec((tm_eff, tn_eff), lambda i, j: (i, j)),
        ),
        compiler_params=pltpu.CompilerParams(
            dimension_semantics=("parallel", "parallel"),
            vmem_limit_bytes=vmem_bytes),
        cost_estimate=cost,
    )(x2, g2, b2, w_p, wb2)

    return out2[:M, :DO].reshape(B, N, DO)


def _reference(x, gamma, beta, w, wb):
    xf = x.astype(jnp.float32)
    mean = jnp.mean(xf, axis=-1, keepdims=True)
    var = jnp.mean((xf - mean) ** 2, axis=-1, keepdims=True)
    xhat = (xf - mean) / jnp.sqrt(var + EPS)
    y = xhat * gamma + beta
    return y @ w + wb


if __name__ == "__main__":
    key = jax.random.PRNGKey(0)
    B, N, D, DO = 2, 8, 32, 32  # batch=2, seq=8, hidden=32

    kx, kw, kb = jax.random.split(key, 3)
    x = jax.random.normal(kx, (B, N, D), dtype=jnp.float32)

    gamma = jnp.ones((D,), dtype=jnp.float32)   # nn.LayerNorm default weight
    beta = jnp.zeros((D,), dtype=jnp.float32)   # nn.LayerNorm default bias
    w = jax.random.normal(kw, (D, DO), dtype=jnp.float32) * 0.02   # fn weight
    wb = jax.random.normal(kb, (DO,), dtype=jnp.float32) * 0.02    # fn bias

    ref = _reference(x, gamma, beta, w, wb)

    # f32 path (exact vs reference).
    out = prenorm_forward(x, gamma, beta, w, wb)
    jax.block_until_ready(out)
    assert out.shape == (B, N, DO)
    assert jnp.allclose(out, ref, atol=1e-4, rtol=1e-4), "f32 mismatch vs reference"

    # bf16-weight path (native MXU rate; f32 accumulation bounds the error).
    out_bf16 = prenorm_forward(x, gamma, beta,
                               w.astype(jnp.bfloat16), wb.astype(jnp.bfloat16))
    jax.block_until_ready(out_bf16)
    assert jnp.allclose(out_bf16, ref, atol=2e-2, rtol=2e-2), "bf16 mismatch vs reference"

    print("KERNEL_OK")
</pallas_src>

<mosaic_0001>
module attributes {stable_mosaic.version = 11 : i64} {
  func.func @_prenorm_kernel(%arg0: i32, %arg1: i32, %arg2: memref<16x32xf32, #tpu.memory_space<vmem>>, %arg3: memref<1x32xf32, #tpu.memory_space<vmem>>, %arg4: memref<1x32xf32, #tpu.memory_space<vmem>>, %arg5: memref<32x128xf32, #tpu.memory_space<vmem>>, %arg6: memref<1x128xf32, #tpu.memory_space<vmem>>, %arg7: memref<16x128xf32, #tpu.memory_space<vmem>>) attributes {dimension_semantics = [#tpu.dimension_semantics<parallel>, #tpu.dimension_semantics<parallel>], iteration_bounds = array<i64: 1, 1>, scalar_prefetch = 0 : i64, scratch_operands = 0 : i64, tpu.core_type = #tpu.core_type<tc>, window_params = [{transform_indices = @transform_0, window_bounds = array<i64: 16, 32>}, {pipeline_mode = #tpu.pipeline_mode<synchronous>, transform_indices = @transform_1, window_bounds = array<i64: 1, 32>}, {pipeline_mode = #tpu.pipeline_mode<synchronous>, transform_indices = @transform_2, window_bounds = array<i64: 1, 32>}, {transform_indices = @transform_3, window_bounds = array<i64: 32, 128>}, {transform_indices = @transform_4, window_bounds = array<i64: 1, 128>}, {transform_indices = @transform_5, window_bounds = array<i64: 16, 128>}]} {
    %c0 = arith.constant 0 : index
    %c0_0 = arith.constant 0 : index
    %0 = vector.load %arg2[%c0, %c0_0] : memref<16x32xf32, #tpu.memory_space<vmem>>, vector<16x32xf32>
    %cst = arith.constant dense<0.000000e+00> : vector<16xf32>
    %1 = vector.multi_reduction <add>, %0, %cst [1] : vector<16x32xf32> to vector<16xf32>
    %2 = vector.shape_cast %1 : vector<16xf32> to vector<16x1xf32>
    %cst_1 = arith.constant 3.200000e+01 : f32
    %3 = vector.broadcast %cst_1 : f32 to vector<16x1xf32>
    %4 = arith.divf %2, %3 : vector<16x1xf32>
    %5 = vector.broadcast %4 : vector<16x1xf32> to vector<16x32xf32>
    %6 = arith.subf %0, %5 : vector<16x32xf32>
    %7 = arith.mulf %6, %6 : vector<16x32xf32>
    %cst_2 = arith.constant dense<0.000000e+00> : vector<16xf32>
    %8 = vector.multi_reduction <add>, %7, %cst_2 [1] : vector<16x32xf32> to vector<16xf32>
    %9 = vector.shape_cast %8 : vector<16xf32> to vector<16x1xf32>
    %cst_3 = arith.constant 3.200000e+01 : f32
    %10 = vector.broadcast %cst_3 : f32 to vector<16x1xf32>
    %11 = arith.divf %9, %10 : vector<16x1xf32>
    %cst_4 = arith.constant 9.99999974E-6 : f32
    %12 = vector.broadcast %cst_4 : f32 to vector<16x1xf32>
    %13 = arith.addf %11, %12 : vector<16x1xf32>
    %14 = math.rsqrt %13 : vector<16x1xf32>
    %15 = vector.broadcast %14 : vector<16x1xf32> to vector<16x32xf32>
    %16 = arith.mulf %6, %15 : vector<16x32xf32>
    %c0_5 = arith.constant 0 : index
    %c0_6 = arith.constant 0 : index
    %17 = vector.load %arg3[%c0_5, %c0_6] : memref<1x32xf32, #tpu.memory_space<vmem>>, vector<1x32xf32>
    %18 = vector.broadcast %17 : vector<1x32xf32> to vector<16x32xf32>
    %19 = arith.mulf %16, %18 : vector<16x32xf32>
    %c0_7 = arith.constant 0 : index
    %c0_8 = arith.constant 0 : index
    %20 = vector.load %arg4[%c0_7, %c0_8] : memref<1x32xf32, #tpu.memory_space<vmem>>, vector<1x32xf32>
    %21 = vector.broadcast %20 : vector<1x32xf32> to vector<16x32xf32>
    %22 = arith.addf %19, %21 : vector<16x32xf32>
    %c0_9 = arith.constant 0 : index
    %c0_10 = arith.constant 0 : index
    %23 = vector.load %arg5[%c0_9, %c0_10] : memref<32x128xf32, #tpu.memory_space<vmem>>, vector<32x128xf32>
    %cst_11 = arith.constant dense<0.000000e+00> : vector<16x128xf32>
    %24 = tpu.matmul %22, %23, %cst_11 {dimension_numbers = #tpu.dot_dimension_numbers<[1], [0], [0], [1], [0, 0, 1, 1], [], []>} : vector<16x32xf32>, vector<32x128xf32>, vector<16x128xf32> -> vector<16x128xf32>
    %c0_12 = arith.constant 0 : index
    %c0_13 = arith.constant 0 : index
    %25 = vector.load %arg6[%c0_12, %c0_13] : memref<1x128xf32, #tpu.memory_space<vmem>>, vector<1x128xf32>
    %26 = vector.broadcast %25 : vector<1x128xf32> to vector<16x128xf32>
    %27 = arith.addf %24, %26 : vector<16x128xf32>
    %c0_14 = arith.constant 0 : index
    %c0_15 = arith.constant 0 : index
    %28 = vector.load %arg7[%c0_14, %c0_15] : memref<16x128xf32, #tpu.memory_space<vmem>>, vector<16x128xf32>
    tpu.vector_store %arg7[%c0_14, %c0_15], %27 {strides = array<i32>} : memref<16x128xf32, #tpu.memory_space<vmem>>, vector<16x128xf32>,
    return
  }
  func.func @transform_0(%arg0: i32, %arg1: i32) -> (i32, i32) {
    %c0_i32 = arith.constant 0 : i32
    %c0_i32_0 = arith.constant 0 : i32
    return %arg0, %c0_i32 : i32, i32
  }
  func.func @transform_1(%arg0: i32, %arg1: i32) -> (i32, i32) {
    %c0_i32 = arith.constant 0 : i32
    %c0_i32_0 = arith.constant 0 : i32
    %c0_i32_1 = arith.constant 0 : i32
    return %c0_i32, %c0_i32_0 : i32, i32
  }
  func.func @transform_2(%arg0: i32, %arg1: i32) -> (i32, i32) {
    %c0_i32 = arith.constant 0 : i32
    %c0_i32_0 = arith.constant 0 : i32
    %c0_i32_1 = arith.constant 0 : i32
    return %c0_i32, %c0_i32_0 : i32, i32
  }
  func.func @transform_3(%arg0: i32, %arg1: i32) -> (i32, i32) {
    %c0_i32 = arith.constant 0 : i32
    %c0_i32_0 = arith.constant 0 : i32
    return %c0_i32, %arg1 : i32, i32
  }
  func.func @transform_4(%arg0: i32, %arg1: i32) -> (i32, i32) {
    %c0_i32 = arith.constant 0 : i32
    %c0_i32_0 = arith.constant 0 : i32
    return %c0_i32, %arg1 : i32, i32
  }
  func.func @transform_5(%arg0: i32, %arg1: i32) -> (i32, i32) {
    %c0_i32 = arith.constant 0 : i32
    return %arg0, %arg1 : i32, i32
  }
}

</mosaic_0001>

<llo_original>
// kernel: prenorm_forward.1
$region0: #{prenorm_forward.1}
  #allocation0 [shape = 'u32[]', space=smem, size = 0x4, offset = 0x4, fixed_abs, tag = 'smem constant byte address 0x4 - core index']
  #allocation1 [shape = 'u32[144,128]{1,0:T(1,128)}', space=vmem, size = 0x12000, scoped, tag = 'internal scratch']
  %s0 = inlined_call_operand.vmem [shape: f32[16,32], index: 0, kind: input, shape index: {}]
  %s1 = inlined_call_operand.vmem [shape: f32[1,32], index: 1, kind: input, shape index: {}]
  %s2 = inlined_call_operand.vmem [shape: f32[1,32], index: 2, kind: input, shape index: {}]
  %s3 = inlined_call_operand.vmem [shape: f32[32,128], index: 3, kind: input, shape index: {}]
  %s4 = inlined_call_operand.vmem [shape: f32[1,128], index: 4, kind: input, shape index: {}]
  %s5 = inlined_call_operand.vmem [shape: f32[16,128], index: 5, kind: output, shape index: {}]
  %s6 = sld [smem:[#allocation0]]
  $region30: #{prenorm_forward.1} parent=0
    _
  %s8 = ssub.s32 1, %s6
  %s9 = scalar_select 0, %s8, %s6
  // Predicated region
  $region2: #{prenorm_forward.1} parent=0 // pred_check
    _
  $region3: #{prenorm_forward.1} parent=0 // pred_check_branch
    %11 = sbr.rel (0) target = $region5
  $region4: #{prenorm_forward.1} parent=0 // pred_region
    _
  $region5: #{prenorm_forward.1} parent=0 // pred_fallthru
    _
  // Predicated region
  $region6: #{prenorm_forward.1} parent=0 // pred_check
    _
  $region7: #{prenorm_forward.1} parent=0 // pred_check_branch
    %13 = sbr.rel (0) target = $region9
  $region8: #{prenorm_forward.1} parent=0 // pred_region
    _
  $region9: #{prenorm_forward.1} parent=0 // pred_fallthru
    _
  // Predicated region
  $region10: #{prenorm_forward.1} parent=0 // pred_check
    _
  $region11: #{prenorm_forward.1} parent=0 // pred_check_branch
    %15 = sbr.rel (0) target = $region13
  $region12: #{prenorm_forward.1} parent=0 // pred_region
    _
  $region13: #{prenorm_forward.1} parent=0 // pred_fallthru
    _
  // Predicated region
  $region14: #{prenorm_forward.1} parent=0 // pred_check
    _
  $region15: #{prenorm_forward.1} parent=0 // pred_check_branch
    %17 = sbr.rel (0) target = $region17
  $region16: #{prenorm_forward.1} parent=0 // pred_region
    _
  $region17: #{prenorm_forward.1} parent=0 // pred_fallthru
    _
  // Predicated region
  $region18: #{prenorm_forward.1} parent=0 // pred_check
    _
  $region19: #{prenorm_forward.1} parent=0 // pred_check_branch
    %19 = sbr.rel (0) target = $region21
  $region20: #{prenorm_forward.1} parent=0 // pred_region
    _
  $region21: #{prenorm_forward.1} parent=0 // pred_fallthru
    _
  %v20 = vld [vmem:[%s0] sm:$0xff]
  %v21 = vld [vmem:[%s0 + $0x8] sm:$0xff]
  %vm22 = vcmask 261120
  %v23 = vsel %vm22, %v20, 0.0
  %24 = vadd.xlane.f32.xlu0 %v23
  %v25 = vpop.xlane.xlu0 %24
  %v26 = vsel %vm22, %v21, 0.0
  %27 = vadd.xlane.f32.xlu0 %v26
  %v28 = vpop.xlane.xlu0 %27
  %v29 = vrcp.pop 32.0
  %v30 = vmul.f32 %v25, %v29
  %v31 = vmul.f32 %v28, %v29
  %v32 = vsub.f32 %v20, %v30
  %v33 = vsub.f32 %v21, %v31
  %v34 = vmul.f32 %v32, %v32
  %v35 = vmul.f32 %v33, %v33
  %v36 = vsel %vm22, %v34, 0.0
  %37 = vadd.xlane.f32.xlu0 %v36
  %v38 = vpop.xlane.xlu0 %37
  %v39 = vsel %vm22, %v35, 0.0
  %40 = vadd.xlane.f32.xlu0 %v39
  %v41 = vpop.xlane.xlu0 %40
  %v42 = vmul.f32 %v38, %v29
  %v43 = vmul.f32 %v41, %v29
  %v44 = vadd.f32 %v42, 1e-05
  %v45 = vadd.f32 %v43, 1e-05
  %v46 = vrsqrt.pop %v44
  %v47 = vrsqrt.pop %v45
  %v48 = vmul.f32 %v32, %v46
  %v49 = vmul.f32 %v33, %v47
  %v50 = vld [vmem:[%s1] sm:$0x1]
  %v52 = vlaneseq
  %v53 = vshrl.u32 %v52, 7
  %v54 = vsub.s32 0, %v53
  %v55 = vrot.slane %v50, %v54
  %v57 = vmul.f32 %v48, %v55
  %v58 = vmul.f32 %v49, %v55
  %v59 = vld [vmem:[%s2] sm:$0x1]
  %v61 = vlaneseq
  %v62 = vshrl.u32 %v61, 7
  %v63 = vsub.s32 0, %v62
  %v64 = vrot.slane %v59, %v63
  %v66 = vadd.f32 %v57, %v64
  %v67 = vadd.f32 %v58, %v64
  %v68 = vld [vmem:[%s3] sm:$0xff]
  %v69 = vld [vmem:[%s3 + $0x8] sm:$0xff]
  %v70 = vld [vmem:[%s3 + $0x10] sm:$0xff]
  %v71 = vld [vmem:[%s3 + $0x18] sm:$0xff]
  %v72 = vld [vmem:[%s4] sm:$0x1]
  %v74 = vlaneseq
  %v75 = vshrl.u32 %v74, 7
  %v76 = vsub.s32 0, %v75
  %v77 = vrot.slane %v72, %v76
  %v80 = vsel %vm22, %v66, 0
  %v83 = vsel %vm22, %v67, 0
  %85 = vmatprep.subr.mxu0 0.0
  %86 = vmatpush1.msra.mxu0 %v68
  %87 = vmatprep.subr.mxu0 0.0
  %88 = vmatpush1.msra.mxu0 %v69
  %89 = vmatprep.subr.mxu0 0.0
  %90 = vmatpush1.msra.mxu0 %v70
  %91 = vmatprep.subr.mxu0 0.0
  %92 = vmatpush1.msra.mxu0 %v71
  %93 = vmatprep.subr.mxu0 0.0
  %94 = vmatpush1.msra.mxu0 0.0
  %95 = vmatprep.subr.mxu0 0.0
  %96 = vmatpush1.msra.mxu0 0.0
  %97 = vmatprep.subr.mxu0 0.0
  %98 = vmatpush1.msra.mxu0 0.0
  %99 = vmatprep.subr.mxu0 0.0
  %100 = vmatpush1.msra.mxu0 0.0
  %101 = vmatprep.subr.mxu0 0.0
  %102 = vmatpush1.msra.mxu0 0.0
  %103 = vmatprep.subr.mxu0 0.0
  %104 = vmatpush1.msra.mxu0 0.0
  %105 = vmatprep.subr.mxu0 0.0
  %106 = vmatpush1.msra.mxu0 0.0
  %107 = vmatprep.subr.mxu0 0.0
  %108 = vmatpush1.msra.mxu0 0.0
  %109 = vmatprep.subr.mxu0 0.0
  %110 = vmatpush1.msra.mxu0 0.0
  %111 = vmatprep.subr.mxu0 0.0
  %112 = vmatpush1.msra.mxu0 0.0
  %113 = vmatprep.subr.mxu0 0.0
  %114 = vmatpush1.msra.mxu0 0.0
  %115 = vmatprep.subr.mxu0 0.0
  %116 = vmatpush1.msra.mxu0 0.0
  %117 = vmatprep.subr.mxu0 0.0
  %118 = vmatpush1.msra.mxu0 0.0
  %119 = vmatprep.subr.mxu0 0.0
  %120 = vmatpush1.msra.mxu0 0.0
  %121 = vmatprep.subr.mxu0 0.0
  %122 = vmatpush1.msra.mxu0 0.0
  %123 = vmatprep.subr.mxu0 0.0
  %124 = vmatpush1.msra.mxu0 0.0
  %125 = vmatprep.subr.mxu0 0.0
  %126 = vmatpush1.msra.mxu0 0.0
  %127 = vmatprep.subr.mxu0 0.0
  %128 = vmatpush1.msra.mxu0 0.0
  %129 = vmatprep.subr.mxu0 0.0
  %130 = vmatpush1.msra.mxu0 0.0
  %131 = vmatprep.subr.mxu0 0.0
  %132 = vmatpush1.msra.mxu0 0.0
  %133 = vmatprep.subr.mxu0 0.0
  %134 = vmatpush1.msra.mxu0 0.0
  %135 = vmatprep.subr.mxu0 0.0
  %136 = vmatpush1.msra.mxu0 0.0
  %137 = vmatprep.subr.mxu0 0.0
  %138 = vmatpush1.msra.mxu0 0.0
  %139 = vmatprep.subr.mxu0 0.0
  %140 = vmatpush1.msra.mxu0 0.0
  %141 = vmatprep.subr.mxu0 0.0
  %142 = vmatpush1.msra.mxu0 0.0
  %143 = vmatprep.subr.mxu0 0.0
  %144 = vmatpush1.msra.mxu0 0.0
  %145 = vmatprep.subr.mxu0 0.0
  %146 = vmatpush1.msra.mxu0 0.0
  %147 = vmatprep.subr.mxu0 0.0
  %148 = vmatpush1.msra.mxu0 0.0
  %149 = vmatprep.mubr.f32.mxu0 0.0
  %150 = vmatmul.mubr.f32.gmra.mrb[0].mxu0 %v80
  %v151 = vpop.f32.mrb[0].mxu0
  %v152 = vadd.f32 %v77, %v151
  %v153 = vpop.f32.mrb[0].mxu0
  %154 = vmatprep.mubr.f32.mxu0 0.0
  %155 = vmatmul.mubr.f32.gmra.mrb[0].mxu0 %v83
  %v156 = vpop.f32.mrb[0].mxu0
  %v157 = vadd.f32 %v77, %v156
  %v158 = vpop.f32.mrb[0].mxu0
  %159 = vdwg.mxu0
  %160 = vst [vmem:[%s5] sm:$0xff] %v152
  %161 = vst [vmem:[%s5 + $0x8] sm:$0xff] %v157
  // Predicated region
  $region22: #{prenorm_forward.1} parent=0 // pred_check
    _
  $region23: #{prenorm_forward.1} parent=0 // pred_check_branch
    %163 = sbr.rel (0) target = $region25
  $region24: #{prenorm_forward.1} parent=0 // pred_region
    _
  $region25: #{prenorm_forward.1} parent=0 // pred_fallthru
    _
  // Predicated region
  $region26: #{prenorm_forward.1} parent=0 // pred_check
    _
  $region27: #{prenorm_forward.1} parent=0 // pred_check_branch
    %165 = sbr.rel (0) target = $region29
  $region28: #{prenorm_forward.1} parent=0 // pred_region
    _
  $region29: #{prenorm_forward.1} parent=0 // pred_fallthru
    _

</llo_original>
